<compile_context>
chip_gen: v6e
topology: v6e:2x2x1
jax: 0.10.0
libtpu: 0.0.40
codegen_flags: <defaults>
</compile_context>

<pallas_src>
import jax
import jax.numpy as jnp
from jax.experimental import pallas as pl
from jax.experimental.pallas import tpu as pltpu

_SELECT_MAX_N = 16  # up to this many cell lines, gather via VPU select


def film_kernel(x_ref, cl_ref, gamma_ref, beta_ref, o_ref):
    # x_ref:     VMEM (TB, TD)  current batch/feature tile
    # cl_ref:    VMEM (TB, 1)   int32 cell-line index per row of this tile
    # gamma_ref: VMEM (N, TD)   resident FiLM scale table (f32, DMA'd once)
    # beta_ref:  VMEM (N, TD)   resident FiLM shift table (f32, DMA'd once)
    # o_ref:     VMEM (TB, TD)
    tb, td = x_ref.shape
    n = gamma_ref.shape[0]

    x = x_ref[...].astype(jnp.float32)
    cl = cl_ref[...]                                   # (TB, 1) int32

    if n <= _SELECT_MAX_N:
        # Unrolled N-way select-accumulate on the VPU (no MXU, no K padding).
        gtab = gamma_ref[...]
        btab = beta_ref[...]
        gamma = jnp.zeros((tb, td), jnp.float32)
        beta = jnp.zeros((tb, td), jnp.float32)
        for i in range(n):
            m = cl == i                                # (TB, 1) bool
            gamma = jnp.where(m, gtab[i:i + 1, :], gamma)
            beta = jnp.where(m, btab[i:i + 1, :], beta)
    else:
        # Fallback for many cell lines: one-hot gather on the MXU (kept in
        # f32 so the gathered rows are not rounded).
        ids = jax.lax.broadcasted_iota(jnp.int32, (tb, n), 1)
        onehot = (cl == ids).astype(jnp.float32)       # (TB, N)
        gamma = jnp.dot(onehot, gamma_ref[...],
                        preferred_element_type=jnp.float32)
        beta = jnp.dot(onehot, beta_ref[...],
                       preferred_element_type=jnp.float32)

    o_ref[...] = (gamma * x + beta).astype(o_ref.dtype)


def _footprint_bytes(tb, td, n, x_bytes):
    """Approximate VMEM working set for one core."""
    n_pad = max(n, 8)
    cl_tile = tb * 128 * 4                 # (TB, 1) int32 pads to 128 lanes
    return (2 * tb * td * x_bytes          # x tiles (double-buffered)
            + 2 * tb * td * x_bytes        # out tiles (double-buffered)
            + 2 * cl_tile                  # cell-line tiles
            + 2 * 2 * n_pad * td * 4       # resident gamma + beta tables
            + 3 * tb * td * 4)             # in-kernel f32 intermediates


def film_forward(x, cell_line, film, *, target_tile_bytes=2 * 1024 * 1024):
    """Pallas implementation of FilmModule.forward([x, cell_line])."""
    B, D = x.shape
    N, two_d = film.shape
    assert two_d == 2 * D

    # Materialize gamma / beta wrapper-side in the compute dtype (f32) so no
    # per-step cast temp is created in the kernel. Tables are tiny.
    gamma = film[:, :D].astype(jnp.float32)
    beta = film[:, D:].astype(jnp.float32)
    cl = jnp.asarray(cell_line, dtype=jnp.int32).reshape(B, 1)

    x_bytes = jnp.dtype(x.dtype).itemsize
    elem_bytes = max(x_bytes, 4)

    # Feature tile: full D unless D is large and a clean multiple of 128.
    if D % 128 == 0 and D > 512:
        td = 512
    else:
        td = D

    # Batch tile: byte-targeted (not row-capped), multiple of 8 sublanes.
    tb = max(8, (target_tile_bytes // (td * elem_bytes)) // 8 * 8)
    # Keep >= ~4 grid steps along batch when possible (v7x: 2 TCs + pipeline).
    min_steps = 4
    tb_split_cap = ((max(1, -(-B // min_steps)) + 7) // 8) * 8
    tb = max(8, min(tb, tb_split_cap))

    # Shrink if the real footprint would exceed a v7x-safe per-core budget.
    budget = 40 * 1024 * 1024
    while tb > 8 and _footprint_bytes(tb, td, N, x_bytes) > budget:
        tb = max(8, (tb // 2) // 8 * 8)

    footprint = _footprint_bytes(tb, td, N, x_bytes)
    vmem_limit = int(min(48 * 1024 * 1024,
                         max(2 * footprint, 8 * 1024 * 1024)))

    grid = (pl.cdiv(B, tb), pl.cdiv(D, td))

    out = pl.pallas_call(
        film_kernel,
        out_shape=jax.ShapeDtypeStruct((B, D), x.dtype),
        grid=grid,
        in_specs=[
            pl.BlockSpec((tb, td), lambda i, j: (i, j)),   # x tile
            pl.BlockSpec((tb, 1), lambda i, j: (i, 0)),    # cell-line tile
            pl.BlockSpec((N, td), lambda i, j: (0, j)),    # gamma (resident)
            pl.BlockSpec((N, td), lambda i, j: (0, j)),    # beta  (resident)
        ],
        out_specs=pl.BlockSpec((tb, td), lambda i, j: (i, j)),
        compiler_params=pltpu.CompilerParams(
            dimension_semantics=("parallel", "parallel"),
            vmem_limit_bytes=vmem_limit),
    )(x, cl, gamma, beta)

    # Module returns [transformed_x, cell_line]
    return [out, cell_line]


def init_film_params(key, num_cell_lines, out_dim, dtype=jnp.float32):
    """Deterministic re-implementation of FilmModule.__init__."""
    film_init = 0.01 * jax.random.normal(
        key, (num_cell_lines, 2 * out_dim), dtype=dtype)
    bias = jnp.concatenate(
        [jnp.ones((1, out_dim), dtype=dtype),
         jnp.zeros((1, out_dim), dtype=dtype)], axis=1)
    return film_init + bias


if __name__ == "__main__":
    num_cell_lines = 4
    out_dim = 32
    batch = 18  # deliberately not a multiple of the tile: exercises the
                # un-padded (partial last block) path

    key = jax.random.PRNGKey(0)
    k_film, k_x, k_cl = jax.random.split(key, 3)

    film = init_film_params(k_film, num_cell_lines, out_dim)
    x = jax.random.normal(k_x, (batch, out_dim), dtype=jnp.float32)
    cell_line = jax.random.randint(k_cl, (batch,), 0, num_cell_lines,
                                   dtype=jnp.int32)

    out, cl_out = film_forward(x, cell_line, film)
    out = jax.block_until_ready(out)

    # Reference (plain JAX) check of semantics.
    gathered = film[cell_line]
    ref = gathered[:, :out_dim] * x + gathered[:, out_dim:]
    assert out.shape == (batch, out_dim)
    assert jnp.allclose(out, ref, atol=1e-5, rtol=1e-5)
    assert jnp.array_equal(cl_out, cell_line)

    print("KERNEL_OK")
</pallas_src>

<mosaic_0001>
module attributes {stable_mosaic.version = 11 : i64} {
  func.func @film_kernel(%arg0: i32, %arg1: i32, %arg2: memref<8x32xf32, #tpu.memory_space<vmem>>, %arg3: memref<8x1xi32, #tpu.memory_space<vmem>>, %arg4: memref<4x32xf32, #tpu.memory_space<vmem>>, %arg5: memref<4x32xf32, #tpu.memory_space<vmem>>, %arg6: memref<8x32xf32, #tpu.memory_space<vmem>>) attributes {dimension_semantics = [#tpu.dimension_semantics<parallel>, #tpu.dimension_semantics<parallel>], iteration_bounds = array<i64: 3, 1>, scalar_prefetch = 0 : i64, scratch_operands = 0 : i64, tpu.core_type = #tpu.core_type<tc>, window_params = [{transform_indices = @transform_0, window_bounds = array<i64: 8, 32>}, {transform_indices = @transform_1, window_bounds = array<i64: 8, 1>}, {transform_indices = @transform_2, window_bounds = array<i64: 4, 32>}, {transform_indices = @transform_3, window_bounds = array<i64: 4, 32>}, {transform_indices = @transform_4, window_bounds = array<i64: 8, 32>}]} {
    %c0 = arith.constant 0 : index
    %c0_0 = arith.constant 0 : index
    %0 = vector.load %arg2[%c0, %c0_0] : memref<8x32xf32, #tpu.memory_space<vmem>>, vector<8x32xf32>
    %c0_1 = arith.constant 0 : index
    %c0_2 = arith.constant 0 : index
    %1 = vector.load %arg3[%c0_1, %c0_2] : memref<8x1xi32, #tpu.memory_space<vmem>>, vector<8x1xi32>
    %c0_3 = arith.constant 0 : index
    %c0_4 = arith.constant 0 : index
    %2 = vector.load %arg4[%c0_3, %c0_4] : memref<4x32xf32, #tpu.memory_space<vmem>>, vector<4x32xf32>
    %c0_5 = arith.constant 0 : index
    %c0_6 = arith.constant 0 : index
    %3 = vector.load %arg5[%c0_5, %c0_6] : memref<4x32xf32, #tpu.memory_space<vmem>>, vector<4x32xf32>
    %cst = arith.constant 0.000000e+00 : f32
    %4 = vector.broadcast %cst : f32 to vector<8x32xf32>
    %cst_7 = arith.constant 0.000000e+00 : f32
    %5 = vector.broadcast %cst_7 : f32 to vector<8x32xf32>
    %c0_i32 = arith.constant 0 : i32
    %6 = vector.broadcast %c0_i32 : i32 to vector<8x1xi32>
    %7 = arith.cmpi eq, %1, %6 : vector<8x1xi32>
    %8 = vector.extract_strided_slice %2 {offsets = [0, 0], sizes = [1, 32], strides = [1, 1]} : vector<4x32xf32> to vector<1x32xf32>
    %9 = vector.shape_cast %7 : vector<8x1xi1> to vector<8x1xi1>
    %10 = vector.broadcast %9 : vector<8x1xi1> to vector<8x32xi1>
    %11 = vector.shape_cast %8 : vector<1x32xf32> to vector<1x32xf32>
    %12 = vector.broadcast %11 : vector<1x32xf32> to vector<8x32xf32>
    %13 = arith.select %10, %12, %4 : vector<8x32xi1>, vector<8x32xf32>
    %14 = vector.extract_strided_slice %3 {offsets = [0, 0], sizes = [1, 32], strides = [1, 1]} : vector<4x32xf32> to vector<1x32xf32>
    %15 = vector.shape_cast %7 : vector<8x1xi1> to vector<8x1xi1>
    %16 = vector.broadcast %15 : vector<8x1xi1> to vector<8x32xi1>
    %17 = vector.shape_cast %14 : vector<1x32xf32> to vector<1x32xf32>
    %18 = vector.broadcast %17 : vector<1x32xf32> to vector<8x32xf32>
    %19 = arith.select %16, %18, %5 : vector<8x32xi1>, vector<8x32xf32>
    %c1_i32 = arith.constant 1 : i32
    %20 = vector.broadcast %c1_i32 : i32 to vector<8x1xi32>
    %21 = arith.cmpi eq, %1, %20 : vector<8x1xi32>
    %22 = vector.extract_strided_slice %2 {offsets = [1, 0], sizes = [1, 32], strides = [1, 1]} : vector<4x32xf32> to vector<1x32xf32>
    %23 = vector.shape_cast %21 : vector<8x1xi1> to vector<8x1xi1>
    %24 = vector.broadcast %23 : vector<8x1xi1> to vector<8x32xi1>
    %25 = vector.shape_cast %22 : vector<1x32xf32> to vector<1x32xf32>
    %26 = vector.broadcast %25 : vector<1x32xf32> to vector<8x32xf32>
    %27 = arith.select %24, %26, %13 : vector<8x32xi1>, vector<8x32xf32>
    %28 = vector.extract_strided_slice %3 {offsets = [1, 0], sizes = [1, 32], strides = [1, 1]} : vector<4x32xf32> to vector<1x32xf32>
    %29 = vector.shape_cast %21 : vector<8x1xi1> to vector<8x1xi1>
    %30 = vector.broadcast %29 : vector<8x1xi1> to vector<8x32xi1>
    %31 = vector.shape_cast %28 : vector<1x32xf32> to vector<1x32xf32>
    %32 = vector.broadcast %31 : vector<1x32xf32> to vector<8x32xf32>
    %33 = arith.select %30, %32, %19 : vector<8x32xi1>, vector<8x32xf32>
    %c2_i32 = arith.constant 2 : i32
    %34 = vector.broadcast %c2_i32 : i32 to vector<8x1xi32>
    %35 = arith.cmpi eq, %1, %34 : vector<8x1xi32>
    %36 = vector.extract_strided_slice %2 {offsets = [2, 0], sizes = [1, 32], strides = [1, 1]} : vector<4x32xf32> to vector<1x32xf32>
    %37 = vector.shape_cast %35 : vector<8x1xi1> to vector<8x1xi1>
    %38 = vector.broadcast %37 : vector<8x1xi1> to vector<8x32xi1>
    %39 = vector.shape_cast %36 : vector<1x32xf32> to vector<1x32xf32>
    %40 = vector.broadcast %39 : vector<1x32xf32> to vector<8x32xf32>
    %41 = arith.select %38, %40, %27 : vector<8x32xi1>, vector<8x32xf32>
    %42 = vector.extract_strided_slice %3 {offsets = [2, 0], sizes = [1, 32], strides = [1, 1]} : vector<4x32xf32> to vector<1x32xf32>
    %43 = vector.shape_cast %35 : vector<8x1xi1> to vector<8x1xi1>
    %44 = vector.broadcast %43 : vector<8x1xi1> to vector<8x32xi1>
    %45 = vector.shape_cast %42 : vector<1x32xf32> to vector<1x32xf32>
    %46 = vector.broadcast %45 : vector<1x32xf32> to vector<8x32xf32>
    %47 = arith.select %44, %46, %33 : vector<8x32xi1>, vector<8x32xf32>
    %c3_i32 = arith.constant 3 : i32
    %48 = vector.broadcast %c3_i32 : i32 to vector<8x1xi32>
    %49 = arith.cmpi eq, %1, %48 : vector<8x1xi32>
    %50 = vector.extract_strided_slice %2 {offsets = [3, 0], sizes = [1, 32], strides = [1, 1]} : vector<4x32xf32> to vector<1x32xf32>
    %51 = vector.shape_cast %49 : vector<8x1xi1> to vector<8x1xi1>
    %52 = vector.broadcast %51 : vector<8x1xi1> to vector<8x32xi1>
    %53 = vector.shape_cast %50 : vector<1x32xf32> to vector<1x32xf32>
    %54 = vector.broadcast %53 : vector<1x32xf32> to vector<8x32xf32>
    %55 = arith.select %52, %54, %41 : vector<8x32xi1>, vector<8x32xf32>
    %56 = vector.extract_strided_slice %3 {offsets = [3, 0], sizes = [1, 32], strides = [1, 1]} : vector<4x32xf32> to vector<1x32xf32>
    %57 = vector.shape_cast %49 : vector<8x1xi1> to vector<8x1xi1>
    %58 = vector.broadcast %57 : vector<8x1xi1> to vector<8x32xi1>
    %59 = vector.shape_cast %56 : vector<1x32xf32> to vector<1x32xf32>
    %60 = vector.broadcast %59 : vector<1x32xf32> to vector<8x32xf32>
    %61 = arith.select %58, %60, %47 : vector<8x32xi1>, vector<8x32xf32>
    %62 = arith.mulf %55, %0 : vector<8x32xf32>
    %63 = arith.addf %62, %61 : vector<8x32xf32>
    %c0_8 = arith.constant 0 : index
    %c0_9 = arith.constant 0 : index
    %64 = vector.load %arg6[%c0_8, %c0_9] : memref<8x32xf32, #tpu.memory_space<vmem>>, vector<8x32xf32>
    tpu.vector_store %arg6[%c0_8, %c0_9], %63 {strides = array<i32>} : memref<8x32xf32, #tpu.memory_space<vmem>>, vector<8x32xf32>,
    return
  }
  func.func @transform_0(%arg0: i32, %arg1: i32) -> (i32, i32) {
    %c0_i32 = arith.constant 0 : i32
    return %arg0, %arg1 : i32, i32
  }
  func.func @transform_1(%arg0: i32, %arg1: i32) -> (i32, i32) {
    %c0_i32 = arith.constant 0 : i32
    %c0_i32_0 = arith.constant 0 : i32
    return %arg0, %c0_i32 : i32, i32
  }
  func.func @transform_2(%arg0: i32, %arg1: i32) -> (i32, i32) {
    %c0_i32 = arith.constant 0 : i32
    %c0_i32_0 = arith.constant 0 : i32
    return %c0_i32, %arg1 : i32, i32
  }
  func.func @transform_3(%arg0: i32, %arg1: i32) -> (i32, i32) {
    %c0_i32 = arith.constant 0 : i32
    %c0_i32_0 = arith.constant 0 : i32
    return %c0_i32, %arg1 : i32, i32
  }
  func.func @transform_4(%arg0: i32, %arg1: i32) -> (i32, i32) {
    %c0_i32 = arith.constant 0 : i32
    return %arg0, %arg1 : i32, i32
  }
}

</mosaic_0001>

<llo_original>
// kernel: tpu_custom_call.1
$region0: #{tpu_custom_call.1}
  #allocation0 [shape = 'u32[]', space=smem, size = 0x4, offset = 0x4, fixed_abs, tag = 'smem constant byte address 0x4 - core index']
  #allocation1 [shape = 'u32[144,128]{1,0:T(1,128)}', space=vmem, size = 0x12000, scoped, tag = 'internal scratch']
  %s0 = inlined_call_operand.vmem [shape: f32[18,32], index: 0, kind: input, shape index: {}]
  %s1 = inlined_call_operand.vmem [shape: s32[18,1], index: 1, kind: input, shape index: {}]
  %s2 = inlined_call_operand.vmem [shape: f32[4,32], index: 2, kind: input, shape index: {}]
  %s3 = inlined_call_operand.hbm [shape: f32[4,32], index: 3, kind: input, shape index: {}]
  %s4 = inlined_call_operand.hbm [shape: f32[18,32], index: 4, kind: output, shape index: {}]
  %s5 = sld [smem:[#allocation0]]
  $region53: #{tpu_custom_call.1} parent=0
    _
  %s7 = ssub.s32 1, %s5
  %s8 = scalar_select 0, %s7, %s5
  $region1: #{tpu_custom_call.1} parent=0
    #allocation2 [shape = 'u8[2048]{0}', space=vmem, size = 0x800, scoped, tag = 'input window, operand 3, single buffered']
    #allocation3 [shape = 's32[2]{0}', space=sflag, size = 0x8, scoped, tag = 'scoped memory for tpu_custom_call.1']
    #allocation4 [shape = 's32[2]{0}', space=sflag, size = 0x8, scoped, tag = 'scoped memory for tpu_custom_call.1']
    #allocation5 [shape = 'u8[8192]{0}', space=vmem, size = 0x2000, scoped, tag = 'output window, operand 0']
    %9 = vsyncpa [#allocation3], 0
    %10 = vsyncpa [#allocation4], 0
    %s11 = scalar_lea.sflag [#allocation4], 1
    %12 = vsyncpa %s11, 0
    loop: start=0, step=1, limit=5
    $region2: #{tpu_custom_call.1} parent=1 // loop_pre_header
      _
    $region3: #{tpu_custom_call.1} parent=1 // loop_header
      %s14 = sphi 0, %s18
      %p15 = scmp.ge.s32.totalorder %s14, 5
      %s21 = sphi 0, %s33
      %s22 = sphi 0, %s29
      %s23 = sphi 0, %s21
      %s24 = sphi 0, %s22
      %s25 = sphi 0, %s23
      %s26 = sphi 0, %s24
      %s38 = sphi 0, %s40
      %s41 = sphi 0, %s38
      %s42 = sphi 0, %s41
      %s58 = sphi 0, %s42
      %s64 = sphi 0, %s66
      %s67 = sphi 0, %s64
      %s68 = sphi 0, %s67
      %s84 = sphi 0, %s68
      %s90 = sphi 0, %s92
      %s93 = sphi 0, %s90
      %s94 = sphi 0, %s93
      %s110 = sphi 0, %s94
      %s116 = sphi 0, %s118
      %s119 = sphi 0, %s116
      %s120 = sphi 0, %s119
      %s136 = sphi 0, %s120
      %s144 = sphi 0, %s146
      %s147 = sphi 0, %s144
      %s148 = sphi 0, %s147
      %s164 = sphi 0, %s148
    $region4: #{tpu_custom_call.1} parent=1 // loop_header_branch
      %17 = sbr.rel (%p15) target = $region8
    $region5: #{tpu_custom_call.1} parent=1 // loop_body
      %s19 = ssub.s32 %s14, 1
      %s20 = ssub.s32 %s14, 2
      %s27 = sadd.s32 1, %s22
      %p28 = scmp.ge.s32.totalorder %s27, 1
      %s29 = scalar_select %p28, 0, %s27
      %s30 = sadd.s32 1, %s21
      %s31 = scalar_select %p28, %s30, %s21
      %p32 = scmp.ge.s32.totalorder %s31, 3
      %s33 = scalar_select %p32, 0, %s31
      %s34 = ssub.s32 %s21, %s33
      %s35 = ssub.s32 %s22, %s29
      %s36 = sor.u32 %s34, %s35
      %p37 = scmp.eq.s32.totalorder %s36, 0
      %s39 = sadd.s32 %s38, 1
      %s40 = scalar_select %p37, %s38, %s39
      %p43 = pneg %p37
      %p44 = scmp.eq.s32.totalorder %s14, 2
      %p45 = por %p43, %p44
      %p46 = scmp.ne.s32.totalorder %s38, %s41
      %p47 = scmp.eq.s32.totalorder %s14, 0
      %p48 = por %p46, %p47
      %p49 = scmp.ne.s32.totalorder %s38, %s41
      %p50 = scmp.eq.s32.totalorder %s19, 2
      %p51 = por %p49, %p50
      %p52 = scmp.ne.s32.totalorder %s41, %s42
      %p53 = scmp.eq.s32.totalorder %s19, 0
      %p54 = por %p52, %p53
      %p55 = scmp.ne.s32.totalorder %s41, %s42
      %p56 = scmp.eq.s32.totalorder %s20, 2
      %p57 = por %p55, %p56
      %p59 = scmp.ne.s32.totalorder %s42, %s58
      %p60 = scmp.eq.s32.totalorder %s20, 0
      %p61 = por %p59, %p60
      %s62 = ssub.s32 %s21, %s33
      %p63 = scmp.eq.s32.totalorder %s62, 0
      %s65 = sadd.s32 %s64, 1
      %s66 = scalar_select %p63, %s64, %s65
      %p69 = pneg %p63
      %p70 = scmp.eq.s32.totalorder %s14, 2
      %p71 = por %p69, %p70
      %p72 = scmp.ne.s32.totalorder %s64, %s67
      %p73 = scmp.eq.s32.totalorder %s14, 0
      %p74 = por %p72, %p73
      %p75 = scmp.ne.s32.totalorder %s64, %s67
      %p76 = scmp.eq.s32.totalorder %s19, 2
      %p77 = por %p75, %p76
      %p78 = scmp.ne.s32.totalorder %s67, %s68
      %p79 = scmp.eq.s32.totalorder %s19, 0
      %p80 = por %p78, %p79
      %p81 = scmp.ne.s32.totalorder %s67, %s68
      %p82 = scmp.eq.s32.totalorder %s20, 2
      %p83 = por %p81, %p82
      %p85 = scmp.ne.s32.totalorder %s68, %s84
      %p86 = scmp.eq.s32.totalorder %s20, 0
      %p87 = por %p85, %p86
      %s88 = ssub.s32 %s22, %s29
      %p89 = scmp.eq.s32.totalorder %s88, 0
      %s91 = sadd.s32 %s90, 1
      %s92 = scalar_select %p89, %s90, %s91
      %p95 = pneg %p89
      %p96 = scmp.eq.s32.totalorder %s14, 2
      %p97 = por %p95, %p96
      %p98 = scmp.ne.s32.totalorder %s90, %s93
      %p99 = scmp.eq.s32.totalorder %s14, 0
      %p100 = por %p98, %p99
      %p101 = scmp.ne.s32.totalorder %s90, %s93
      %p102 = scmp.eq.s32.totalorder %s19, 2
      %p103 = por %p101, %p102
      %p104 = scmp.ne.s32.totalorder %s93, %s94
      %p105 = scmp.eq.s32.totalorder %s19, 0
      %p106 = por %p104, %p105
      %p107 = scmp.ne.s32.totalorder %s93, %s94
      %p108 = scmp.eq.s32.totalorder %s20, 2
      %p109 = por %p107, %p108
      %p111 = scmp.ne.s32.totalorder %s94, %s110
      %p112 = scmp.eq.s32.totalorder %s20, 0
      %p113 = por %p111, %p112
      %s114 = ssub.s32 %s22, %s29
      %p115 = scmp.eq.s32.totalorder %s114, 0
      %s117 = sadd.s32 %s116, 1
      %s118 = scalar_select %p115, %s116, %s117
      %p121 = pneg %p115
      %p122 = scmp.eq.s32.totalorder %s14, 2
      %p123 = por %p121, %p122
      %p124 = scmp.ne.s32.totalorder %s116, %s119
      %p125 = scmp.eq.s32.totalorder %s14, 0
      %p126 = por %p124, %p125
      %p127 = scmp.ne.s32.totalorder %s116, %s119
      %p128 = scmp.eq.s32.totalorder %s19, 2
      %p129 = por %p127, %p128
      %p130 = scmp.ne.s32.totalorder %s119, %s120
      %p131 = scmp.eq.s32.totalorder %s19, 0
      %p132 = por %p130, %p131
      %p133 = scmp.ne.s32.totalorder %s119, %s120
      %p134 = scmp.eq.s32.totalorder %s20, 2
      %p135 = por %p133, %p134
      %p137 = scmp.ne.s32.totalorder %s120, %s136
      %p138 = scmp.eq.s32.totalorder %s20, 0
      %p139 = por %p137, %p138
      %s140 = ssub.s32 %s21, %s33
      %s141 = ssub.s32 %s22, %s29
      %s142 = sor.u32 %s140, %s141
      %p143 = scmp.eq.s32.totalorder %s142, 0
      %s145 = sadd.s32 %s144, 1
      %s146 = scalar_select %p143, %s144, %s145
      %p149 = pneg %p143
      %p150 = scmp.eq.s32.totalorder %s14, 2
      %p151 = por %p149, %p150
      %p152 = scmp.ne.s32.totalorder %s144, %s147
      %p153 = scmp.eq.s32.totalorder %s14, 0
      %p154 = por %p152, %p153
      %p155 = scmp.ne.s32.totalorder %s144, %s147
      %p156 = scmp.eq.s32.totalorder %s19, 2
      %p157 = por %p155, %p156
      %p158 = scmp.ne.s32.totalorder %s147, %s148
      %p159 = scmp.eq.s32.totalorder %s19, 0
      %p160 = por %p158, %p159
      %p161 = scmp.ne.s32.totalorder %s147, %s148
      %p162 = scmp.eq.s32.totalorder %s20, 2
      %p163 = por %p161, %p162
      %p165 = scmp.ne.s32.totalorder %s148, %s164
      %p166 = scmp.eq.s32.totalorder %s20, 0
      %p167 = por %p165, %p166
      %p168 = scmp.le.s32.totalorder 1, %s14
      %p169 = scmp.lt.s32.totalorder %s14, 4
      %p170 = pnand %p168, %p169
      %p171 = pneg %p170
      // Predicated region
      $region9: #{tpu_custom_call.1} parent=5 // pred_check
        _
      $region10: #{tpu_custom_call.1} parent=5 // pred_check_branch
        %173 = sbr.rel (%p170) target = $region12
      $region11: #{tpu_custom_call.1} parent=5 // pred_region
        %s174 = ssub.s32 %s14, 1
        // Predicated region
        $region13: #{tpu_custom_call.1} parent=11 // pred_check
          %p175 = pneg %p106
        $region14: #{tpu_custom_call.1} parent=11 // pred_check_branch
          %177 = sbr.rel (%p175) target = $region16
        $region15: #{tpu_custom_call.1} parent=11 // pred_region
          %p178 = scmp.lt.s32.totalorder %s24, 0
          %s179 = scalar_select %p178, %s24, 0
          %s180 = smul.addr %s179, 4
          %s181 = scalar_lea.vmem %s2, %s180
        $region16: #{tpu_custom_call.1} parent=11 // pred_fallthru
          _
        // Predicated region
        $region17: #{tpu_custom_call.1} parent=11 // pred_check
          %p182 = pneg %p132
        $region18: #{tpu_custom_call.1} parent=11 // pred_check_branch
          %184 = sbr.rel (%p182) target = $region20
        $region19: #{tpu_custom_call.1} parent=11 // pred_region
          %s186 = ssub.s32 64, 64
          %187 = vsyncadd [#allocation3], %s186
          %s188 = smul.addr %s24, 64
          %s189 = scalar_lea.hbm %s3, %s188
          %s191 = sshll.u32 [#allocation2], 4
          %s192 = int_to_ptr.vmem [resolvable:$true] %s191
          %194 = dma.hbm_to_vmem [thread:$0]  %s189, 64, %s192, [#allocation3]
        $region20: #{tpu_custom_call.1} parent=11 // pred_fallthru
          _
      $region12: #{tpu_custom_call.1} parent=5 // pred_fallthru
        _
      %p195 = scmp.lt.s32.totalorder %s14, 3
      // Predicated region
      $region21: #{tpu_custom_call.1} parent=5 // pred_check
        %p196 = pneg %p195
      $region22: #{tpu_custom_call.1} parent=5 // pred_check_branch
        %198 = sbr.rel (%p196) target = $region24
      $region23: #{tpu_custom_call.1} parent=5 // pred_region
        // Predicated region
        $region25: #{tpu_custom_call.1} parent=23 // pred_check
          %p199 = pneg %p48
        $region26: #{tpu_custom_call.1} parent=23 // pred_check_branch
          %201 = sbr.rel (%p199) target = $region28
        $region27: #{tpu_custom_call.1} parent=23 // pred_region
          %p202 = scmp.lt.s32.totalorder %s21, 2
          %s203 = scalar_select %p202, %s21, 2
          %p204 = scmp.lt.s32.totalorder %s22, 0
          %s205 = scalar_select %p204, %s22, 0
          %s206 = sadd.s32 %s205, %s203
          %s207 = smul.addr %s206, 8
          %s208 = scalar_lea.vmem %s0, %s207
        $region28: #{tpu_custom_call.1} parent=23 // pred_fallthru
          _
        // Predicated region
        $region29: #{tpu_custom_call.1} parent=23 // pred_check
          %p209 = pneg %p74
        $region30: #{tpu_custom_call.1} parent=23 // pred_check_branch
          %211 = sbr.rel (%p209) target = $region32
        $region31: #{tpu_custom_call.1} parent=23 // pred_region
          %p212 = scmp.lt.s32.totalorder %s21, 2
          %s213 = scalar_select %p212, %s21, 2
          %s214 = smul.addr %s213, 8
          %s215 = scalar_lea.vmem %s1, %s214
        $region32: #{tpu_custom_call.1} parent=23 // pred_fallthru
          _
      $region24: #{tpu_custom_call.1} parent=5 // pred_fallthru
        _
      %p216 = scmp.le.s32.totalorder 1, %s14
      %p217 = scmp.lt.s32.totalorder %s14, 4
      %p218 = pnand %p216, %p217
      %p219 = pneg %p218
      // Predicated region
      $region33: #{tpu_custom_call.1} parent=5 // pred_check
        _
      $region34: #{tpu_custom_call.1} parent=5 // pred_check_branch
        %221 = sbr.rel (%p218) target = $region36
      $region35: #{tpu_custom_call.1} parent=5 // pred_region
        %s222 = ssub.s32 %s14, 1
        // Predicated region
        $region37: #{tpu_custom_call.1} parent=35 // pred_check
          %p223 = pneg %p132
        $region38: #{tpu_custom_call.1} parent=35 // pred_check_branch
          %225 = sbr.rel (%p223) target = $region40
        $region39: #{tpu_custom_call.1} parent=35 // pred_region
          %226 = dma.done [#allocation3], 64
        $region40: #{tpu_custom_call.1} parent=35 // pred_fallthru
          _
        %p227 = scmp.lt.s32.totalorder %s23, 2
        %s228 = scalar_select %p227, %s23, 2
        %p229 = scmp.lt.s32.totalorder %s24, 0
        %s230 = scalar_select %p229, %s24, 0
        %s231 = sadd.s32 %s230, %s228
        %s232 = smul.addr %s231, 8
        %s233 = scalar_lea.vmem %s0, %s232
        %p234 = pneg %p54
        %p235 = pneg %p51
        %p236 = scmp.lt.s32.totalorder %s23, 2
        %s237 = scalar_select %p236, %s23, 2
        %s238 = smul.addr %s237, 8
        %s239 = scalar_lea.vmem %s1, %s238
        %p240 = pneg %p80
        %p241 = pneg %p77
        %p242 = scmp.lt.s32.totalorder %s24, 0
        %s243 = scalar_select %p242, %s24, 0
        %s244 = smul.addr %s243, 4
        %s245 = scalar_lea.vmem %s2, %s244
        %p246 = pneg %p106
        %p247 = pneg %p103
        %p248 = pneg %p132
        %p249 = pneg %p129
        %p250 = pneg %p160
        %p251 = pneg %p157
        %s252 = sand.u32 %s147, 1
        %s253 = scalar_lea.sflag [#allocation4], %s252
        %s254 = sand.u32 %s147, 1
        %s255 = smul.addr %s254, 8
        %s256 = scalar_lea.vmem [#allocation5], %s255
        %p257 = scmp.lt.s32.totalorder %s23, 2
        %s258 = scalar_select %p257, %s23, 2
        %p259 = scmp.lt.s32.totalorder %s24, 0
        %s260 = scalar_select %p259, %s24, 0
        %s261 = sadd.s32 %s260, %s258
        %s262 = smul.addr %s261, 8
        %s263 = scalar_lea.vmem %s0, %s262
        %p264 = scmp.lt.s32.totalorder %s23, 2
        %s265 = scalar_select %p264, %s23, 2
        %s266 = smul.addr %s265, 8
        %s267 = scalar_lea.vmem %s1, %s266
        %p268 = scmp.lt.s32.totalorder %s24, 0
        %s269 = scalar_select %p268, %s24, 0
        %s270 = smul.addr %s269, 4
        %s271 = scalar_lea.vmem %s2, %s270
        %v272 = vld [vmem:[%s263] sm:$0xff]
        %v273 = vld [vmem:[%s267] sm:$0xff]
        %v274 = vld [vmem:[%s271] sm:$0xf]
        %v275 = vld [vmem:[#allocation2] sm:$0xf]
        %vm276 = vcmp.eq.s32.totalorder %v273, 0
        %v277 = vsel %vm276, 1, 0
        %278 = vset.pattern.permute.xlu0 0
        %279 = vperm.xlu0 %278, %v277
        %v280 = vpop.permute.xlu0 %279
        %vm281 = vcmp.eq.s32.totalorder %v280, 1
        %v282 = vlaneseq
        %v283 = vshrl.u32 %v282, 7
        %v284 = vsub.s32 0, %v283
        %v285 = vrot.slane %v274, %v284
        %v286 = vsel %vm281, %v285, 0.0
        %v287 = vlaneseq
        %v288 = vshrl.u32 %v287, 7
        %v289 = vsub.s32 0, %v288
        %v290 = vrot.slane %v275, %v289
        %v291 = vsel %vm281, %v290, 0.0
        %vm292 = vcmp.eq.s32.totalorder %v273, 1
        %v293 = vsel %vm292, 1, 0
        %294 = vset.pattern.permute.xlu0 0
        %295 = vperm.xlu0 %294, %v293
        %v296 = vpop.permute.xlu0 %295
        %vm297 = vcmp.eq.s32.totalorder %v296, 1
        %v298 = vlaneseq
        %v299 = vshrl.u32 %v298, 7
        %v300 = vsub.s32 1, %v299
        %v301 = vrot.slane %v274, %v300
        %v302 = vsel %vm297, %v301, %v286
        %v303 = vlaneseq
        %v304 = vshrl.u32 %v303, 7
        %v305 = vsub.s32 1, %v304
        %v306 = vrot.slane %v275, %v305
        %v307 = vsel %vm297, %v306, %v291
        %vm308 = vcmp.eq.s32.totalorder %v273, 2
        %v309 = vsel %vm308, 1, 0
        %310 = vset.pattern.permute.xlu0 0
        %311 = vperm.xlu0 %310, %v309
        %v312 = vpop.permute.xlu0 %311
        %vm313 = vcmp.eq.s32.totalorder %v312, 1
        %v314 = vlaneseq
        %v315 = vshrl.u32 %v314, 7
        %v316 = vsub.s32 2, %v315
        %v317 = vrot.slane %v274, %v316
        %v318 = vsel %vm313, %v317, %v302
        %v319 = vlaneseq
        %v320 = vshrl.u32 %v319, 7
        %v321 = vsub.s32 2, %v320
        %v322 = vrot.slane %v275, %v321
        %v323 = vsel %vm313, %v322, %v307
        %vm324 = vcmp.eq.s32.totalorder %v273, 3
        %v325 = vsel %vm324, 1, 0
        %326 = vset.pattern.permute.xlu0 0
        %327 = vperm.xlu0 %326, %v325
        %v328 = vpop.permute.xlu0 %327
        %vm329 = vcmp.eq.s32.totalorder %v328, 1
        %v330 = vlaneseq
        %v331 = vshrl.u32 %v330, 7
        %v332 = vsub.s32 3, %v331
        %v333 = vrot.slane %v274, %v332
        %v334 = vsel %vm329, %v333, %v318
        %v335 = vlaneseq
        %v336 = vshrl.u32 %v335, 7
        %v337 = vsub.s32 3, %v336
        %v338 = vrot.slane %v275, %v337
        %v339 = vsel %vm329, %v338, %v323
        %v340 = vmul.f32 %v334, %v272
        %v341 = vadd.f32 %v340, %v339
        %vm342 = vcmask 261120
        %343 = vst.msk [vmem:[%s256] sm:$0xff] %vm342, %v341
        %s344 = sand.u32 %s147, 1
        %s345 = scalar_lea.sflag [#allocation4], %s344
        %s346 = sand.u32 %s147, 1
        %s347 = smul.addr %s346, 8
        %s348 = scalar_lea.vmem [#allocation5], %s347
        // Predicated region
        $region41: #{tpu_custom_call.1} parent=35 // pred_check
          %p349 = pneg %p157
        $region42: #{tpu_custom_call.1} parent=35 // pred_check_branch
          %351 = sbr.rel (%p349) target = $region44
        $region43: #{tpu_custom_call.1} parent=35 // pred_region
          %s353 = ssub.s32 128, 128
          %354 = vsyncadd %s345, %s353
          %s355 = sadd.s32 %s24, %s23
          %s356 = smul.addr %s355, 128
          %s357 = scalar_lea.hbm %s4, %s356
          %s359 = sshll.u32 %s348, 4
          %s360 = int_to_ptr.vmem [resolvable:$true] %s359
          %362 = dma.vmem_to_hbm [thread:$0]  %s360, 128, %s357, %s345
        $region44: #{tpu_custom_call.1} parent=35 // pred_fallthru
          _
      $region36: #{tpu_custom_call.1} parent=5 // pred_fallthru
        _
      %p363 = scmp.le.s32.totalorder 2, %s14
      // Predicated region
      $region45: #{tpu_custom_call.1} parent=5 // pred_check
        %p364 = pneg %p363
      $region46: #{tpu_custom_call.1} parent=5 // pred_check_branch
        %366 = sbr.rel (%p364) target = $region48
      $region47: #{tpu_custom_call.1} parent=5 // pred_region
        %s367 = ssub.s32 %s14, 2
        // Predicated region
        $region49: #{tpu_custom_call.1} parent=47 // pred_check
          %p368 = pneg %p163
        $region50: #{tpu_custom_call.1} parent=47 // pred_check_branch
          %370 = sbr.rel (%p368) target = $region52
        $region51: #{tpu_custom_call.1} parent=47 // pred_region
          %s371 = sand.u32 %s148, 1
          %s372 = scalar_lea.sflag [#allocation4], %s371
          %s373 = sand.u32 %s148, 1
          %s374 = smul.addr %s373, 8
          %s375 = scalar_lea.vmem [#allocation5], %s374
          %376 = dma.done %s372, 128
        $region52: #{tpu_custom_call.1} parent=47 // pred_fallthru
          _
      $region48: #{tpu_custom_call.1} parent=5 // pred_fallthru
        _
    $region6: #{tpu_custom_call.1} parent=1 // loop_footer
      %s18 = sadd.s32 1, %s14
    $region7: #{tpu_custom_call.1} parent=1 // loop_footer_branch
      %13 = sbr.rel target = $region3
    $region8: #{tpu_custom_call.1} parent=1 // loop_exit
      _
    %377 = vsyncpa [#allocation3], 1
    %s378 = scalar_lea.sflag [#allocation3], 1
    %379 = vsyncpa %s378, 1
    %380 = vsyncpa [#allocation4], 1
    %s381 = scalar_lea.sflag [#allocation4], 1
    %382 = vsyncpa %s381, 1

</llo_original>
